<compile_context>
chip_gen: v7x
topology: tpu7x:2x2x1
jax: 0.10.0
libtpu: 0.0.40
codegen_flags: <defaults>
</compile_context>

<pallas_src>
import numpy as np
import jax
import jax.numpy as jnp
from jax import lax
from jax.experimental import pallas as pl
from jax.experimental.pallas import tpu as pltpu

HIDDEN = 32      # hidden size of the wrapped nn.LSTM
TILE_B = 512     # batch-tile width (lanes); multiple of 128 so tiled blocks stay layout-clean


def td_lstm_kernel(x_ref, w_ref, b_ref, y_ref):
    """One LSTM cell step over a batch tile, in the transposed (gates^T) formulation.

    x_ref : (M, TB)   flattened-input tile (M = prod(leading dims), TB = batch tile), bf16
    w_ref : (3H, M)   W_ih with the dead forget-gate rows stripped; gate order [i | g | o], bf16
    b_ref : (3H, 1)   b_ih + b_hh (forget rows stripped), f32
    y_ref : (H, TB)   h_1^T, f32
    """
    h = y_ref.shape[0]

    # Single MXU matmul per tile: (3H, M) @ (M, TB) -> (3H, TB), f32 accumulate.
    gates = lax.dot_general(
        w_ref[...], x_ref[...],
        dimension_numbers=(((1,), (0,)), ((), ())),
        preferred_element_type=jnp.float32) + b_ref[...]

    # Sublane slices at 8-aligned offsets (0, 32, 64): clean vreg subsets, no lane relayout.
    # sigmoid(z) = 0.5 * (1 + tanh(z / 2))  -- stable, EUP transcendental.
    i_g = 0.5 * (jnp.tanh(0.5 * gates[0 * h:1 * h, :]) + 1.0)   # input gate
    # forget gate omitted: it multiplies c0 == 0 (rows already stripped from W/b)
    g_g = jnp.tanh(gates[1 * h:2 * h, :])                       # cell candidate
    o_g = 0.5 * (jnp.tanh(0.5 * gates[2 * h:3 * h, :]) + 1.0)   # output gate

    c = i_g * g_g                                               # c1 = f*c0 + i*g, c0 == 0
    y_ref[...] = (o_g * jnp.tanh(c)).astype(y_ref.dtype)        # lane-dense, unmasked store


def time_distributed_forward(x, lstm_params, *, matmul_dtype=jnp.bfloat16):
    """Replicates TimeDistributed(nn.LSTM(input_size=prod(x.shape[:-1]), hidden_size=H)).forward(x)
    for x.ndim > 2.  Returns y of shape (1, x.shape[-1], H) in float32."""
    w_ih, w_hh, b_ih, b_hh = lstm_params
    # TODO(synk): the len(x.size()) <= 2 passthrough branch of TimeDistributed (direct module
    # call on a rank-<=2 input) is not implemented; only the reshape-and-run-LSTM path is.
    assert x.ndim > 2, "only the x.ndim > 2 path of TimeDistributed is implemented"

    d_last = x.shape[-1]
    m = int(np.prod(x.shape[:-1]))
    four_h = w_ih.shape[0]
    hid = four_h // 4
    assert w_ih.shape == (four_h, m), "LSTM input_size must equal prod(x.shape[:-1])"
    del w_hh  # h0 == 0 -> recurrent weights never contribute (seq_len == 1 by construction)

    # Free view (no HBM transpose); the bf16 cast would fuse with x's producer in a real model.
    x_flat = x.reshape(m, d_last).astype(matmul_dtype)

    # Strip the dead forget-gate rows -> (3H, M) weights / (3H, 1) bias, gate order [i | g | o].
    w3 = jnp.concatenate([w_ih[:hid], w_ih[2 * hid:]], axis=0).astype(matmul_dtype)
    b = b_ih + b_hh
    b3 = jnp.concatenate([b[:hid], b[2 * hid:]]).reshape(3 * hid, 1).astype(jnp.float32)

    # Batch (D_last) tiling: full-batch block when small, else 512-lane tiles (multiple of 128).
    tile_b = d_last if d_last <= TILE_B else TILE_B
    grid = (pl.cdiv(d_last, tile_b),)

    h_t = pl.pallas_call(
        td_lstm_kernel,
        out_shape=jax.ShapeDtypeStruct((hid, d_last), jnp.float32),
        grid=grid,
        in_specs=[
            pl.BlockSpec((m, tile_b), lambda i: (0, i)),          # x tile: pipelined along batch
            pl.BlockSpec((3 * hid, m), lambda i: (0, 0)),         # weights: VMEM-resident
            pl.BlockSpec((3 * hid, 1), lambda i: (0, 0)),         # bias: VMEM-resident
        ],
        out_specs=pl.BlockSpec((hid, tile_b), lambda i: (0, i)),  # h^T tile: lane-dense store
        compiler_params=pltpu.CompilerParams(
            dimension_semantics=("parallel",)),                   # megacore split on v7x
    )(x_flat, w3, b3)

    # Final module orientation (1, D_last, H): a tiny (H x D_last f32) XLA transpose of the
    # result (negligible vs x traffic; fuses with downstream consumers).
    return jnp.transpose(h_t)[None]


def init_lstm_params(key, input_size, hidden):
    ks = jax.random.split(key, 4)
    s = 0.1
    return (s * jax.random.normal(ks[0], (4 * hidden, input_size), jnp.float32),  # weight_ih_l0
            s * jax.random.normal(ks[1], (4 * hidden, hidden), jnp.float32),      # weight_hh_l0
            s * jax.random.normal(ks[2], (4 * hidden,), jnp.float32),             # bias_ih_l0
            s * jax.random.normal(ks[3], (4 * hidden,), jnp.float32))             # bias_hh_l0


def reference(x, lstm_params):
    """Independent numpy reference: full single-step LSTM with zero initial states."""
    w_ih, w_hh, b_ih, b_hh = [np.asarray(p, np.float32) for p in lstm_params]
    d_last = x.shape[-1]
    x2 = np.asarray(x, np.float32).reshape(-1, d_last).T       # (D_last, M) = LSTM batch x features
    hid = w_hh.shape[1]
    h0 = np.zeros((d_last, hid), np.float32)
    c0 = np.zeros((d_last, hid), np.float32)
    gates = x2 @ w_ih.T + h0 @ w_hh.T + (b_ih + b_hh)
    sig = lambda z: 1.0 / (1.0 + np.exp(-z))
    i = sig(gates[:, 0 * hid:1 * hid])
    f = sig(gates[:, 1 * hid:2 * hid])
    g = np.tanh(gates[:, 2 * hid:3 * hid])
    o = sig(gates[:, 3 * hid:4 * hid])
    c = f * c0 + i * g
    h = o * np.tanh(c)
    return h[None].astype(np.float32)                          # (1, D_last, H)


if __name__ == "__main__":
    key = jax.random.PRNGKey(0)
    pkey, xkey, xkey2 = jax.random.split(key, 3)

    # Small example consistent with the module: the wrapped LSTM's input_size must equal
    # prod(x.shape[:-1]) because of the view(-1, D).T trick.
    x = jax.random.normal(xkey, (2, 4, 16, 16), jnp.float32)
    input_size = int(np.prod(x.shape[:-1]))                     # 128
    params = init_lstm_params(pkey, input_size, HIDDEN)

    fwd = jax.jit(time_distributed_forward)

    y = fwd(x, params)
    jax.block_until_ready(y)
    assert y.shape == (1, x.shape[-1], HIDDEN)
    # bf16 matmul inputs (f32 accumulate / f32 gate math) -> relaxed tolerance per review.
    np.testing.assert_allclose(np.asarray(y, np.float32), reference(x, params),
                               rtol=2e-2, atol=2e-2)

    # Second (still small) case exercising the batch grid: D_last = 1024 -> two 512-lane tiles.
    x_big = jax.random.normal(xkey2, (2, 4, 16, 1024), jnp.float32)
    y_big = fwd(x_big, params)
    jax.block_until_ready(y_big)
    assert y_big.shape == (1, x_big.shape[-1], HIDDEN)
    np.testing.assert_allclose(np.asarray(y_big, np.float32), reference(x_big, params),
                               rtol=2e-2, atol=2e-2)

    print("KERNEL_OK")
</pallas_src>

<mosaic_0001>
module attributes {stable_mosaic.version = 11 : i64} {
  func.func @td_lstm_kernel(%arg0: i32, %arg1: memref<128x16xbf16, #tpu.memory_space<vmem>>, %arg2: memref<96x128xbf16, #tpu.memory_space<vmem>>, %arg3: memref<96x1xf32, #tpu.memory_space<vmem>>, %arg4: memref<32x16xf32, #tpu.memory_space<vmem>>) attributes {dimension_semantics = [#tpu.dimension_semantics<parallel>], iteration_bounds = array<i64: 1>, scalar_prefetch = 0 : i64, scratch_operands = 0 : i64, tpu.core_type = #tpu.core_type<tc>, window_params = [{transform_indices = @transform_0, window_bounds = array<i64: 128, 16>}, {pipeline_mode = #tpu.pipeline_mode<synchronous>, transform_indices = @transform_1, window_bounds = array<i64: 96, 128>}, {pipeline_mode = #tpu.pipeline_mode<synchronous>, transform_indices = @transform_2, window_bounds = array<i64: 96, 1>}, {transform_indices = @transform_3, window_bounds = array<i64: 32, 16>}]} {
    %c0 = arith.constant 0 : index
    %c0_0 = arith.constant 0 : index
    %0 = vector.load %arg2[%c0, %c0_0] : memref<96x128xbf16, #tpu.memory_space<vmem>>, vector<96x128xbf16>
    %c0_1 = arith.constant 0 : index
    %c0_2 = arith.constant 0 : index
    %1 = vector.load %arg1[%c0_1, %c0_2] : memref<128x16xbf16, #tpu.memory_space<vmem>>, vector<128x16xbf16>
    %cst = arith.constant dense<0.000000e+00> : vector<96x16xf32>
    %2 = tpu.matmul %0, %1, %cst {dimension_numbers = #tpu.dot_dimension_numbers<[1], [0], [0], [1], [0, 0, 1, 1], [], []>} : vector<96x128xbf16>, vector<128x16xbf16>, vector<96x16xf32> -> vector<96x16xf32>
    %c0_3 = arith.constant 0 : index
    %c0_4 = arith.constant 0 : index
    %3 = vector.load %arg3[%c0_3, %c0_4] : memref<96x1xf32, #tpu.memory_space<vmem>>, vector<96x1xf32>
    %4 = vector.broadcast %3 : vector<96x1xf32> to vector<96x16xf32>
    %5 = arith.addf %2, %4 : vector<96x16xf32>
    %6 = vector.extract_strided_slice %5 {offsets = [0, 0], sizes = [32, 16], strides = [1, 1]} : vector<96x16xf32> to vector<32x16xf32>
    %cst_5 = arith.constant 5.000000e-01 : f32
    %7 = vector.broadcast %cst_5 : f32 to vector<32x16xf32>
    %8 = arith.mulf %7, %6 : vector<32x16xf32>
    %9 = math.tanh %8 : vector<32x16xf32>
    %cst_6 = arith.constant 1.000000e+00 : f32
    %10 = vector.broadcast %cst_6 : f32 to vector<32x16xf32>
    %11 = arith.addf %9, %10 : vector<32x16xf32>
    %cst_7 = arith.constant 5.000000e-01 : f32
    %12 = vector.broadcast %cst_7 : f32 to vector<32x16xf32>
    %13 = arith.mulf %12, %11 : vector<32x16xf32>
    %14 = vector.extract_strided_slice %5 {offsets = [32, 0], sizes = [32, 16], strides = [1, 1]} : vector<96x16xf32> to vector<32x16xf32>
    %15 = math.tanh %14 : vector<32x16xf32>
    %16 = vector.extract_strided_slice %5 {offsets = [64, 0], sizes = [32, 16], strides = [1, 1]} : vector<96x16xf32> to vector<32x16xf32>
    %cst_8 = arith.constant 5.000000e-01 : f32
    %17 = vector.broadcast %cst_8 : f32 to vector<32x16xf32>
    %18 = arith.mulf %17, %16 : vector<32x16xf32>
    %19 = math.tanh %18 : vector<32x16xf32>
    %cst_9 = arith.constant 1.000000e+00 : f32
    %20 = vector.broadcast %cst_9 : f32 to vector<32x16xf32>
    %21 = arith.addf %19, %20 : vector<32x16xf32>
    %cst_10 = arith.constant 5.000000e-01 : f32
    %22 = vector.broadcast %cst_10 : f32 to vector<32x16xf32>
    %23 = arith.mulf %22, %21 : vector<32x16xf32>
    %24 = arith.mulf %13, %15 : vector<32x16xf32>
    %25 = math.tanh %24 : vector<32x16xf32>
    %26 = arith.mulf %23, %25 : vector<32x16xf32>
    %c0_11 = arith.constant 0 : index
    %c0_12 = arith.constant 0 : index
    %27 = vector.load %arg4[%c0_11, %c0_12] : memref<32x16xf32, #tpu.memory_space<vmem>>, vector<32x16xf32>
    tpu.vector_store %arg4[%c0_11, %c0_12], %26 {strides = array<i32>} : memref<32x16xf32, #tpu.memory_space<vmem>>, vector<32x16xf32>,
    return
  }
  func.func @transform_0(%arg0: i32) -> (i32, i32) {
    %c0_i32 = arith.constant 0 : i32
    %c0_i32_0 = arith.constant 0 : i32
    return %c0_i32, %arg0 : i32, i32
  }
  func.func @transform_1(%arg0: i32) -> (i32, i32) {
    %c0_i32 = arith.constant 0 : i32
    %c0_i32_0 = arith.constant 0 : i32
    %c0_i32_1 = arith.constant 0 : i32
    return %c0_i32, %c0_i32_0 : i32, i32
  }
  func.func @transform_2(%arg0: i32) -> (i32, i32) {
    %c0_i32 = arith.constant 0 : i32
    %c0_i32_0 = arith.constant 0 : i32
    %c0_i32_1 = arith.constant 0 : i32
    return %c0_i32, %c0_i32_0 : i32, i32
  }
  func.func @transform_3(%arg0: i32) -> (i32, i32) {
    %c0_i32 = arith.constant 0 : i32
    %c0_i32_0 = arith.constant 0 : i32
    return %c0_i32, %arg0 : i32, i32
  }
}

</mosaic_0001>

<llo_original>
// kernel: time_distributed_forward.1
$region0: #{time_distributed_forward.1}
  #allocation0 [shape = 'u32[]', space=smem, size = 0x4, offset = 0x4, fixed_abs, tag = 'smem constant byte address 0x4 - core index']
  #allocation1 [shape = 'u32[144,128]{1,0:T(1,128)}', space=vmem, size = 0x12000, scoped, tag = 'internal scratch']
  %s0 = inlined_call_operand.vmem [shape: bf16[128,16], index: 0, kind: input, shape index: {}]
  %s1 = inlined_call_operand.vmem [shape: bf16[96,128], index: 1, kind: input, shape index: {}]
  %s2 = inlined_call_operand.vmem [shape: f32[96,1], index: 2, kind: input, shape index: {}]
  %s3 = inlined_call_operand.vmem [shape: f32[32,16], index: 3, kind: output, shape index: {}]
  %s4 = sld [smem:[#allocation0]]
  $region22: #{time_distributed_forward.1} parent=0
    _
  %s6 = ssub.s32 1, %s4
  %s7 = scalar_select 0, %s6, %s4
  // Predicated region
  $region2: #{time_distributed_forward.1} parent=0 // pred_check
    _
  $region3: #{time_distributed_forward.1} parent=0 // pred_check_branch
    %9 = sbr.rel (0) target = $region5
  $region4: #{time_distributed_forward.1} parent=0 // pred_region
    _
  $region5: #{time_distributed_forward.1} parent=0 // pred_fallthru
    _
  // Predicated region
  $region6: #{time_distributed_forward.1} parent=0 // pred_check
    _
  $region7: #{time_distributed_forward.1} parent=0 // pred_check_branch
    %11 = sbr.rel (0) target = $region9
  $region8: #{time_distributed_forward.1} parent=0 // pred_region
    _
  $region9: #{time_distributed_forward.1} parent=0 // pred_fallthru
    _
  // Predicated region
  $region10: #{time_distributed_forward.1} parent=0 // pred_check
    _
  $region11: #{time_distributed_forward.1} parent=0 // pred_check_branch
    %13 = sbr.rel (0) target = $region13
  $region12: #{time_distributed_forward.1} parent=0 // pred_region
    _
  $region13: #{time_distributed_forward.1} parent=0 // pred_fallthru
    _
  %v15 = vld [vmem:[%s1] sm:$0xf]
  %v16 = vld [vmem:[%s1 + $0x4] sm:$0xf]
  %v17 = vld [vmem:[%s1 + $0x8] sm:$0xf]
  %v18 = vld [vmem:[%s1 + $0xc] sm:$0xf]
  %v19 = vld [vmem:[%s1 + $0x10] sm:$0xf]
  %v20 = vld [vmem:[%s1 + $0x14] sm:$0xf]
  %v21 = vld [vmem:[%s1 + $0x18] sm:$0xf]
  %v22 = vld [vmem:[%s1 + $0x1c] sm:$0xf]
  %v23 = vld [vmem:[%s1 + $0x20] sm:$0xf]
  %v24 = vld [vmem:[%s1 + $0x24] sm:$0xf]
  %v25 = vld [vmem:[%s1 + $0x28] sm:$0xf]
  %v26 = vld [vmem:[%s1 + $0x2c] sm:$0xf]
  %v27 = vld [vmem:[%s0] sm:$0xf]
  %v28 = vld [vmem:[%s0 + $0x4] sm:$0xf]
  %v29 = vld [vmem:[%s0 + $0x8] sm:$0xf]
  %v30 = vld [vmem:[%s0 + $0xc] sm:$0xf]
  %v31 = vld [vmem:[%s0 + $0x10] sm:$0xf]
  %v32 = vld [vmem:[%s0 + $0x14] sm:$0xf]
  %v33 = vld [vmem:[%s0 + $0x18] sm:$0xf]
  %v34 = vld [vmem:[%s0 + $0x1c] sm:$0xf]
  %v35 = vld [vmem:[%s0 + $0x20] sm:$0xf]
  %v36 = vld [vmem:[%s0 + $0x24] sm:$0xf]
  %v37 = vld [vmem:[%s0 + $0x28] sm:$0xf]
  %v38 = vld [vmem:[%s0 + $0x2c] sm:$0xf]
  %v39 = vld [vmem:[%s0 + $0x30] sm:$0xf]
  %v40 = vld [vmem:[%s0 + $0x34] sm:$0xf]
  %v41 = vld [vmem:[%s0 + $0x38] sm:$0xf]
  %v42 = vld [vmem:[%s0 + $0x3c] sm:$0xf]
  %v43 = vld [vmem:[%s2] sm:$0xff]
  %v44 = vld [vmem:[%s2 + $0x8] sm:$0xff]
  %v45 = vld [vmem:[%s2 + $0x10] sm:$0xff]
  %v46 = vld [vmem:[%s2 + $0x18] sm:$0xff]
  %v47 = vld [vmem:[%s2 + $0x20] sm:$0xff]
  %v48 = vld [vmem:[%s2 + $0x28] sm:$0xff]
  %v49 = vld [vmem:[%s2 + $0x30] sm:$0xff]
  %v50 = vld [vmem:[%s2 + $0x38] sm:$0xff]
  %v51 = vld [vmem:[%s2 + $0x40] sm:$0xff]
  %v52 = vld [vmem:[%s2 + $0x48] sm:$0xff]
  %v53 = vld [vmem:[%s2 + $0x50] sm:$0xff]
  %v54 = vld [vmem:[%s2 + $0x58] sm:$0xff]
  %56 = vset.pattern.permute.xlu0 0
  %57 = vperm.xlu0 %56, %v43
  %v58 = vpop.permute.xlu0 %57
  %61 = vset.pattern.permute.xlu0 0
  %62 = vperm.xlu0 %61, %v44
  %v63 = vpop.permute.xlu0 %62
  %66 = vset.pattern.permute.xlu0 0
  %67 = vperm.xlu0 %66, %v45
  %v68 = vpop.permute.xlu0 %67
  %71 = vset.pattern.permute.xlu0 0
  %72 = vperm.xlu0 %71, %v46
  %v73 = vpop.permute.xlu0 %72
  %76 = vset.pattern.permute.xlu0 0
  %77 = vperm.xlu0 %76, %v47
  %v78 = vpop.permute.xlu0 %77
  %81 = vset.pattern.permute.xlu0 0
  %82 = vperm.xlu0 %81, %v48
  %v83 = vpop.permute.xlu0 %82
  %86 = vset.pattern.permute.xlu0 0
  %87 = vperm.xlu0 %86, %v49
  %v88 = vpop.permute.xlu0 %87
  %91 = vset.pattern.permute.xlu0 0
  %92 = vperm.xlu0 %91, %v50
  %v93 = vpop.permute.xlu0 %92
  %96 = vset.pattern.permute.xlu0 0
  %97 = vperm.xlu0 %96, %v51
  %v98 = vpop.permute.xlu0 %97
  %101 = vset.pattern.permute.xlu0 0
  %102 = vperm.xlu0 %101, %v52
  %v103 = vpop.permute.xlu0 %102
  %106 = vset.pattern.permute.xlu0 0
  %107 = vperm.xlu0 %106, %v53
  %v108 = vpop.permute.xlu0 %107
  %111 = vset.pattern.permute.xlu0 0
  %112 = vperm.xlu0 %111, %v54
  %v113 = vpop.permute.xlu0 %112
  %v127 = vunpack.c.l.b16 %v15
  %v128 = vunpack.c.l.b16 %v16
  %v129 = vunpack.c.l.b16 %v17
  %v130 = vunpack.c.l.b16 %v18
  %v131 = vunpack.c.l.b16 %v19
  %v132 = vunpack.c.l.b16 %v20
  %v133 = vunpack.c.l.b16 %v21
  %v134 = vunpack.c.l.b16 %v22
  %v135 = vunpack.c.l.b16 %v23
  %v136 = vunpack.c.l.b16 %v24
  %v137 = vunpack.c.l.b16 %v25
  %v138 = vunpack.c.l.b16 %v26
  %v139 = vpack.c.b16 %v128, %v127
  %v140 = vpack.c.b16 %v130, %v129
  %v141 = vpack.c.b16 %v132, %v131
  %v142 = vpack.c.b16 %v134, %v133
  %v143 = vpack.c.b16 %v136, %v135
  %v144 = vpack.c.b16 %v138, %v137
  %v167 = vunpack.c.l.b16 %v27
  %v168 = vunpack.c.l.b16 %v28
  %v169 = vunpack.c.l.b16 %v29
  %v170 = vunpack.c.l.b16 %v30
  %v171 = vunpack.c.l.b16 %v31
  %v172 = vunpack.c.l.b16 %v32
  %v173 = vunpack.c.l.b16 %v33
  %v174 = vunpack.c.l.b16 %v34
  %v175 = vunpack.c.l.b16 %v35
  %v176 = vunpack.c.l.b16 %v36
  %v177 = vunpack.c.l.b16 %v37
  %v178 = vunpack.c.l.b16 %v38
  %v179 = vunpack.c.l.b16 %v39
  %v180 = vunpack.c.l.b16 %v40
  %v181 = vunpack.c.l.b16 %v41
  %v182 = vunpack.c.l.b16 %v42
  %v183 = vpack.c.b16 %v168, %v167
  %v184 = vpack.c.b16 %v170, %v169
  %v185 = vpack.c.b16 %v172, %v171
  %v186 = vpack.c.b16 %v174, %v173
  %v187 = vpack.c.b16 %v176, %v175
  %v188 = vpack.c.b16 %v178, %v177
  %v189 = vpack.c.b16 %v180, %v179
  %v190 = vpack.c.b16 %v182, %v181
  %199 = vmatprep.subr.bf16.mxu0 0
  %200 = vmatpush1.bf16.msra.mxu0 %v183
  %201 = vmatprep.subr.bf16.mxu0 0
  %202 = vmatpush1.bf16.msra.mxu0 %v184
  %203 = vmatprep.subr.bf16.mxu0 0
  %204 = vmatpush1.bf16.msra.mxu0 %v185
  %205 = vmatprep.subr.bf16.mxu0 0
  %206 = vmatpush1.bf16.msra.mxu0 %v186
  %207 = vmatprep.subr.bf16.mxu0 0
  %208 = vmatpush1.bf16.msra.mxu0 %v187
  %209 = vmatprep.subr.bf16.mxu0 0
  %210 = vmatpush1.bf16.msra.mxu0 %v188
  %211 = vmatprep.subr.bf16.mxu0 0
  %212 = vmatpush1.bf16.msra.mxu0 %v189
  %213 = vmatprep.subr.bf16.mxu0 0
  %214 = vmatpush1.bf16.msra.mxu0 %v190
  %215 = vmatprep.subr.bf16.mxu0 0
  %216 = vmatpush1.bf16.msra.mxu0 0
  %217 = vmatprep.subr.bf16.mxu0 0
  %218 = vmatpush1.bf16.msra.mxu0 0
  %219 = vmatprep.subr.bf16.mxu0 0
  %220 = vmatpush1.bf16.msra.mxu0 0
  %221 = vmatprep.subr.bf16.mxu0 0
  %222 = vmatpush1.bf16.msra.mxu0 0
  %223 = vmatprep.subr.bf16.mxu0 0
  %224 = vmatpush1.bf16.msra.mxu0 0
  %225 = vmatprep.subr.bf16.mxu0 0
  %226 = vmatpush1.bf16.msra.mxu0 0
  %227 = vmatprep.subr.bf16.mxu0 0
  %228 = vmatpush1.bf16.msra.mxu0 0
  %229 = vmatprep.subr.bf16.mxu0 0
  %230 = vmatpush1.bf16.msra.mxu0 0
  %231 = vmatprep.mubr.bf16.mxu0 0
  %232 = vmatmul.mubr.bf16.gmra.mrb[0].mxu0 %v139
  %v233 = vpop.f32.mrb[0].mxu0
  %v234 = vadd.f32 %v58, %v233
  %v235 = vpop.f32.mrb[0].mxu0
  %v236 = vpop.f32.mrb[0].mxu0
  %v237 = vadd.f32 %v63, %v236
  %v238 = vpop.f32.mrb[0].mxu0
  %239 = vmatprep.mubr.bf16.mxu0 0
  %240 = vmatmul.mubr.bf16.gmra.mrb[0].mxu0 %v140
  %v241 = vpop.f32.mrb[0].mxu0
  %v242 = vadd.f32 %v68, %v241
  %v243 = vpop.f32.mrb[0].mxu0
  %v244 = vpop.f32.mrb[0].mxu0
  %v245 = vadd.f32 %v73, %v244
  %v246 = vpop.f32.mrb[0].mxu0
  %247 = vmatprep.mubr.bf16.mxu0 0
  %248 = vmatmul.mubr.bf16.gmra.mrb[0].mxu0 %v141
  %v249 = vpop.f32.mrb[0].mxu0
  %v250 = vadd.f32 %v78, %v249
  %v251 = vpop.f32.mrb[0].mxu0
  %v252 = vpop.f32.mrb[0].mxu0
  %v253 = vadd.f32 %v83, %v252
  %v254 = vpop.f32.mrb[0].mxu0
  %255 = vmatprep.mubr.bf16.mxu0 0
  %256 = vmatmul.mubr.bf16.gmra.mrb[0].mxu0 %v142
  %v257 = vpop.f32.mrb[0].mxu0
  %v258 = vadd.f32 %v88, %v257
  %v259 = vpop.f32.mrb[0].mxu0
  %v260 = vpop.f32.mrb[0].mxu0
  %v261 = vadd.f32 %v93, %v260
  %v262 = vpop.f32.mrb[0].mxu0
  %263 = vmatprep.mubr.bf16.mxu0 0
  %264 = vmatmul.mubr.bf16.gmra.mrb[0].mxu0 %v143
  %v265 = vpop.f32.mrb[0].mxu0
  %v266 = vadd.f32 %v98, %v265
  %v267 = vpop.f32.mrb[0].mxu0
  %v268 = vpop.f32.mrb[0].mxu0
  %v269 = vadd.f32 %v103, %v268
  %v270 = vpop.f32.mrb[0].mxu0
  %271 = vmatprep.mubr.bf16.mxu0 0
  %272 = vmatmul.mubr.bf16.gmra.mrb[0].mxu0 %v144
  %v273 = vpop.f32.mrb[0].mxu0
  %v274 = vadd.f32 %v108, %v273
  %v275 = vpop.f32.mrb[0].mxu0
  %v276 = vpop.f32.mrb[0].mxu0
  %v277 = vadd.f32 %v113, %v276
  %v278 = vpop.f32.mrb[0].mxu0
  %279 = vdwg.mxu0
  %v280 = vmul.f32 %v234, 0.5
  %v281 = vmul.f32 %v237, 0.5
  %v282 = vmul.f32 %v242, 0.5
  %v283 = vmul.f32 %v245, 0.5
  %v284 = vtanh.pop %v280
  %v285 = vtanh.pop %v281
  %v286 = vtanh.pop %v282
  %v287 = vtanh.pop %v283
  %v288 = vadd.f32 %v284, 1.0
  %v289 = vadd.f32 %v285, 1.0
  %v290 = vadd.f32 %v286, 1.0
  %v291 = vadd.f32 %v287, 1.0
  %v292 = vmul.f32 %v288, 0.5
  %v293 = vmul.f32 %v289, 0.5
  %v294 = vmul.f32 %v290, 0.5
  %v295 = vmul.f32 %v291, 0.5
  %v296 = vtanh.pop %v250
  %v297 = vtanh.pop %v253
  %v298 = vtanh.pop %v258
  %v299 = vtanh.pop %v261
  %v300 = vmul.f32 %v266, 0.5
  %v301 = vmul.f32 %v269, 0.5
  %v302 = vmul.f32 %v274, 0.5
  %v303 = vmul.f32 %v277, 0.5
  %v304 = vtanh.pop %v300
  %v305 = vtanh.pop %v301
  %v306 = vtanh.pop %v302
  %v307 = vtanh.pop %v303
  %v308 = vadd.f32 %v304, 1.0
  %v309 = vadd.f32 %v305, 1.0
  %v310 = vadd.f32 %v306, 1.0
  %v311 = vadd.f32 %v307, 1.0
  %v312 = vmul.f32 %v308, 0.5
  %v313 = vmul.f32 %v309, 0.5
  %v314 = vmul.f32 %v310, 0.5
  %v315 = vmul.f32 %v311, 0.5
  %v316 = vmul.f32 %v292, %v296
  %v317 = vmul.f32 %v293, %v297
  %v318 = vmul.f32 %v294, %v298
  %v319 = vmul.f32 %v295, %v299
  %v320 = vtanh.pop %v316
  %v321 = vtanh.pop %v317
  %v322 = vtanh.pop %v318
  %v323 = vtanh.pop %v319
  %v324 = vmul.f32 %v312, %v320
  %v325 = vmul.f32 %v313, %v321
  %v326 = vmul.f32 %v314, %v322
  %v327 = vmul.f32 %v315, %v323
  %vm328 = vcmask 130048
  %329 = vst.msk [vmem:[%s3] sm:$0xff] %vm328, %v324
  %330 = vst.msk [vmem:[%s3 + $0x8] sm:$0xff] %vm328, %v325
  %331 = vst.msk [vmem:[%s3 + $0x10] sm:$0xff] %vm328, %v326
  %332 = vst.msk [vmem:[%s3 + $0x18] sm:$0xff] %vm328, %v327
  // Predicated region
  $region14: #{time_distributed_forward.1} parent=0 // pred_check
    _
  $region15: #{time_distributed_forward.1} parent=0 // pred_check_branch
    %334 = sbr.rel (0) target = $region17
  $region16: #{time_distributed_forward.1} parent=0 // pred_region
    _
  $region17: #{time_distributed_forward.1} parent=0 // pred_fallthru
    _
  // Predicated region
  $region18: #{time_distributed_forward.1} parent=0 // pred_check
    _
  $region19: #{time_distributed_forward.1} parent=0 // pred_check_branch
    %336 = sbr.rel (0) target = $region21
  $region20: #{time_distributed_forward.1} parent=0 // pred_region
    _
  $region21: #{time_distributed_forward.1} parent=0 // pred_fallthru
    _

</llo_original>
